<compile_context>
chip_gen: v5e
topology: v5e:2x2
jax: 0.10.0
libtpu: 0.0.40
codegen_flags: <defaults>
</compile_context>

<pallas_src>
import functools

import jax
import jax.numpy as jnp
from jax import lax
from jax.experimental import pallas as pl
from jax.experimental.pallas import tpu as pltpu


def talking_head_attention_kernel(
    x_ref,        # (1, N, C)   bf16  VMEM  (same block for every query tile)
    wqkv_ref,     # (C, 3C)     bf16  VMEM  (constant across grid)
    wp_ref,       # (C, C)      bf16  VMEM  (constant across grid)
    bp_ref,       # (1, C)      f32   VMEM  (constant across grid)
    wl_exp_ref,   # (H, C)      f32   row g': wl[g', c//hd] * scale
    ww_exp_ref,   # (H, C)      f32   row g': ww[c//hd, g']
    bw_exp_ref,   # (1, C)      f32   bw[c//hd]
    out_ref,      # (1, Tq, C)  f32   VMEM
    qkv_ref,      # (N, 3C)     bf16  VMEM scratch, persists across query tiles
    *, num_heads, block_q,
):
    t = pl.program_id(1)                     # query-tile index (per batch element)
    N, C3 = qkv_ref.shape
    C = C3 // 3
    H = num_heads
    tq = block_q

    # Fused QKV projection, computed once per batch element (tile 0) and cached
    # in bf16 VMEM scratch for all subsequent query tiles of the same batch.
    @pl.when(t == 0)
    def _():
        qkv_ref[...] = jnp.dot(
            x_ref[0], wqkv_ref[...], preferred_element_type=jnp.float32
        ).astype(qkv_ref.dtype)

    k = qkv_ref[:, C:2 * C]                              # (N, C)  bf16
    v = qkv_ref[:, 2 * C:3 * C]                          # (N, C)  bf16
    row0 = pl.multiple_of(t * tq, tq)
    q = qkv_ref[pl.ds(row0, tq), 0:C].astype(jnp.float32)   # (Tq, C) f32

    wl_e = wl_exp_ref[...]                               # (H, C) f32
    ww_e = ww_exp_ref[...]                               # (H, C) f32

    # proj_w bias folded exactly: bw[g] * (ones(N,N) @ v_g) == bw[g] * colsum(v_g)
    v_colsum = jnp.sum(v.astype(jnp.float32), axis=0, keepdims=True)   # (1, C)
    ctx = bw_exp_ref[...] * v_colsum                     # (1, C) -> broadcasts below

    # Loop over mixed (post-proj_l) heads g'.  H is small and static -> unrolled.
    for gp in range(H):
        # proj_l (and the 1/sqrt(hd) scale) folded into a per-column scaling of Q:
        # (Q ⊙ wl_exp[g']) @ K^T == sum_h wl[g',h]*scale * (Q_h @ K_h^T)
        q_g = (q * wl_e[gp][None, :]).astype(jnp.bfloat16)              # (Tq, C)
        s = lax.dot_general(q_g, k, (((1,), (1,)), ((), ())),
                            preferred_element_type=jnp.float32)         # (Tq, N)
        # proj_l bias bl[g'] is constant along the softmax axis -> cancels; omitted.
        s = s - jnp.max(s, axis=-1, keepdims=True)
        e = jnp.exp(s)
        inv = pl.reciprocal(jnp.sum(e, axis=-1, keepdims=True), approx=True)
        p = (e * inv).astype(jnp.bfloat16)                               # (Tq, N)
        # probs @ V for all value heads at once (MXU, K = N), then the proj_w mix
        # reduces to a per-column scale (ww_exp row g') -- no (N,N) VPU passes.
        u = jnp.dot(p, v, preferred_element_type=jnp.float32)            # (Tq, C)
        ctx = ctx + u * ww_e[gp][None, :]

    # Output projection (bf16 weights, f32 accumulation) + bias.
    out = jnp.dot(ctx.astype(jnp.bfloat16), wp_ref[...],
                  preferred_element_type=jnp.float32) + bp_ref[...]
    out_ref[0] = out.astype(out_ref.dtype)


def _pick_block_q(n, requested=None):
    if requested is not None:
        assert n % requested == 0, "block_q must divide N"
        return requested
    for cand in (256, 128, 64, 32, 16, 8):
        if n % cand == 0:
            return cand
    # Ragged N (not a multiple of 8, e.g. CaiT N=577): fall back to one untiled
    # query block.  Padding N with key masking would enable tiling there too.
    return n


def _vmem_limit_bytes():
    try:
        cap = int(pltpu.get_tpu_info().vmem_capacity_bytes)
    except Exception:
        cap = 64 * 1024 * 1024
    # Leave ~25% headroom for compiler scratch / pipeline buffers:
    # ~48 MiB on v7x (64 MiB VMEM), ~96 MiB on v5e/v6e (128 MiB VMEM).
    return max(32 * 1024 * 1024, min((cap * 3) // 4, 112 * 1024 * 1024))


def talking_head_attention(x, params, *, num_heads, qk_scale=None, block_q=None):
    B, N, C = x.shape
    H = num_heads
    assert C % H == 0
    hd = C // H
    scale = qk_scale if qk_scale is not None else hd ** (-0.5)
    tq = _pick_block_q(N, block_q)
    n_tiles = N // tq

    # bf16 weights/activations: half the HBM/VMEM traffic; MXU is bf16-native.
    wqkv = params["wqkv"].astype(jnp.bfloat16)
    wp = params["wp"].astype(jnp.bfloat16)
    x_in = x.astype(jnp.bfloat16)

    # Expand the tiny talking-head weights to per-column scale vectors (trace-time):
    #   wl_exp[g', c] = wl[g', c // hd] * scale      (pre-softmax mix, scale folded)
    #   ww_exp[g', c] = ww[c // hd, g']              (post-softmax mix)
    #   bw_exp[0, c]  = bw[c // hd]                  (proj_w bias, via colsum(V))
    wl_exp = jnp.repeat(params["wl"].astype(jnp.float32) * scale, hd, axis=1)
    ww_exp = jnp.repeat(params["ww"].astype(jnp.float32).T, hd, axis=1)
    bw_exp = jnp.repeat(params["bw"].astype(jnp.float32), hd)[None, :]
    # proj_l bias (bl) cancels exactly in the softmax -> not passed to the kernel.

    kernel = functools.partial(talking_head_attention_kernel,
                               num_heads=H, block_q=tq)

    grid_spec = pltpu.PrefetchScalarGridSpec(
        num_scalar_prefetch=0,
        grid=(B, n_tiles),
        in_specs=[
            pl.BlockSpec((1, N, C), lambda b, t: (b, 0, 0)),       # x
            pl.BlockSpec((C, 3 * C), lambda b, t: (0, 0)),         # wqkv (const)
            pl.BlockSpec((C, C), lambda b, t: (0, 0)),             # wp   (const)
            pl.BlockSpec((1, C), lambda b, t: (0, 0)),             # bp   (const)
            pl.BlockSpec((H, C), lambda b, t: (0, 0)),             # wl_exp (const)
            pl.BlockSpec((H, C), lambda b, t: (0, 0)),             # ww_exp (const)
            pl.BlockSpec((1, C), lambda b, t: (0, 0)),             # bw_exp (const)
        ],
        out_specs=pl.BlockSpec((1, tq, C), lambda b, t: (b, t, 0)),
        scratch_shapes=[pltpu.VMEM((N, 3 * C), jnp.bfloat16)],     # cached QKV
    )

    return pl.pallas_call(
        kernel,
        out_shape=jax.ShapeDtypeStruct((B, N, C), jnp.float32),
        grid_spec=grid_spec,
        compiler_params=pltpu.CompilerParams(
            # batch axis parallel (megacore); query-tile axis must stay
            # "arbitrary" because the QKV scratch carries across it.
            dimension_semantics=("parallel", "arbitrary"),
            vmem_limit_bytes=_vmem_limit_bytes(),
        ),
    )(x_in, wqkv, wp, params["bp"].astype(jnp.float32), wl_exp, ww_exp, bw_exp)


def talking_head_attention_ref(x, params, *, num_heads, qk_scale=None):
    """Pure-JAX reference mirroring the PyTorch forward (eval mode)."""
    B, N, C = x.shape
    H = num_heads
    hd = C // H
    scale = qk_scale if qk_scale is not None else hd ** (-0.5)
    # Match the kernel's bf16 weight/activation storage so the comparison
    # isolates kernel correctness rather than bf16 rounding.
    wqkv = params["wqkv"].astype(jnp.bfloat16).astype(jnp.float32)
    wp = params["wp"].astype(jnp.bfloat16).astype(jnp.float32)
    xb = x.astype(jnp.bfloat16).astype(jnp.float32)

    qkv = (xb @ wqkv).reshape(B, N, 3, H, hd).transpose(2, 0, 3, 1, 4)
    q, k, v = qkv[0] * scale, qkv[1], qkv[2]                  # (B, H, N, hd)
    attn = q @ jnp.swapaxes(k, -2, -1)                        # (B, H, N, N)
    attn = (jnp.einsum('bhij,gh->bgij', attn, params["wl"])
            + params["bl"][None, :, None, None])
    attn = jax.nn.softmax(attn, axis=-1)
    attn = (jnp.einsum('bhij,gh->bgij', attn, params["ww"])
            + params["bw"][None, :, None, None])
    out = jnp.swapaxes(attn @ v, 1, 2).reshape(B, N, C)       # (B, N, C)
    return out @ wp + params["bp"]


def init_params(key, dim, num_heads):
    ks = jax.random.split(key, 7)
    s = 0.02
    hs = 1.0 / (num_heads ** 0.5)
    return {
        # qkv: Linear(dim, 3*dim, bias=False), stored transposed (in, out)
        "wqkv": s * jax.random.normal(ks[0], (dim, 3 * dim), jnp.float32),
        # proj: Linear(dim, dim), stored transposed (in, out)
        "wp": s * jax.random.normal(ks[1], (dim, dim), jnp.float32),
        "bp": s * jax.random.normal(ks[2], (1, dim), jnp.float32),
        # proj_l / proj_w: Linear(H, H) in PyTorch layout (out, in)
        "wl": hs * jax.random.normal(ks[3], (num_heads, num_heads), jnp.float32),
        "bl": hs * jax.random.normal(ks[4], (num_heads,), jnp.float32),
        "ww": hs * jax.random.normal(ks[5], (num_heads, num_heads), jnp.float32),
        "bw": hs * jax.random.normal(ks[6], (num_heads,), jnp.float32),
    }


if __name__ == "__main__":
    B, N, C, H = 2, 16, 32, 4   # batch, tokens, channels, heads
    key = jax.random.PRNGKey(0)
    kx, kp = jax.random.split(key)
    x = jax.random.normal(kx, (B, N, C), jnp.float32)
    params = init_params(kp, C, H)

    ref = talking_head_attention_ref(x, params, num_heads=H)

    # Tiled path: two query tiles per batch element (exercises QKV-scratch reuse).
    out_tiled = talking_head_attention(x, params, num_heads=H, block_q=8)
    jax.block_until_ready(out_tiled)
    assert out_tiled.shape == (B, N, C)
    assert jnp.allclose(out_tiled, ref, atol=2e-2, rtol=2e-2), \
        float(jnp.max(jnp.abs(out_tiled - ref)))

    # Default (single query tile) path.
    out_full = talking_head_attention(x, params, num_heads=H)
    jax.block_until_ready(out_full)
    assert jnp.allclose(out_full, ref, atol=2e-2, rtol=2e-2), \
        float(jnp.max(jnp.abs(out_full - ref)))

    print("KERNEL_OK")
</pallas_src>

<mosaic_0001>
module attributes {stable_mosaic.version = 11 : i64} {
  func.func @talking_head_attention_kernel(%arg0: i32, %arg1: i32, %arg2: memref<1x16x32xbf16, #tpu.memory_space<vmem>>, %arg3: memref<32x96xbf16, #tpu.memory_space<vmem>>, %arg4: memref<32x32xbf16, #tpu.memory_space<vmem>>, %arg5: memref<1x32xf32, #tpu.memory_space<vmem>>, %arg6: memref<4x32xf32, #tpu.memory_space<vmem>>, %arg7: memref<4x32xf32, #tpu.memory_space<vmem>>, %arg8: memref<1x32xf32, #tpu.memory_space<vmem>>, %arg9: memref<1x8x32xf32, #tpu.memory_space<vmem>>, %arg10: memref<16x96xbf16, #tpu.memory_space<vmem>>) attributes {dimension_semantics = [#tpu.dimension_semantics<parallel>, #tpu.dimension_semantics<arbitrary>], iteration_bounds = array<i64: 2, 2>, scalar_prefetch = 0 : i64, scratch_operands = 1 : i64, tpu.core_type = #tpu.core_type<tc>, window_params = [{transform_indices = @transform_0, window_bounds = array<i64: 1, 16, 32>}, {pipeline_mode = #tpu.pipeline_mode<synchronous>, transform_indices = @transform_1, window_bounds = array<i64: 32, 96>}, {pipeline_mode = #tpu.pipeline_mode<synchronous>, transform_indices = @transform_2, window_bounds = array<i64: 32, 32>}, {pipeline_mode = #tpu.pipeline_mode<synchronous>, transform_indices = @transform_3, window_bounds = array<i64: 1, 32>}, {pipeline_mode = #tpu.pipeline_mode<synchronous>, transform_indices = @transform_4, window_bounds = array<i64: 4, 32>}, {pipeline_mode = #tpu.pipeline_mode<synchronous>, transform_indices = @transform_5, window_bounds = array<i64: 4, 32>}, {pipeline_mode = #tpu.pipeline_mode<synchronous>, transform_indices = @transform_6, window_bounds = array<i64: 1, 32>}, {transform_indices = @transform_7, window_bounds = array<i64: 1, 8, 32>}]} {
    %c0_i32 = arith.constant 0 : i32
    %0 = arith.cmpi eq, %arg1, %c0_i32 : i32
    %1 = arith.extui %0 : i1 to i32
    %c0_i32_0 = arith.constant 0 : i32
    %2 = arith.cmpi ne, %1, %c0_i32_0 : i32
    scf.if %2 {
      %c0_33 = arith.constant 0 : index
      %c0_34 = arith.constant 0 : index
      %c0_35 = arith.constant 0 : index
      %127 = vector.load %arg2[%c0_33, %c0_34, %c0_35] : memref<1x16x32xbf16, #tpu.memory_space<vmem>>, vector<1x16x32xbf16>
      %128 = vector.shape_cast %127 : vector<1x16x32xbf16> to vector<16x32xbf16>
      %c0_36 = arith.constant 0 : index
      %c0_37 = arith.constant 0 : index
      %129 = vector.load %arg3[%c0_36, %c0_37] : memref<32x96xbf16, #tpu.memory_space<vmem>>, vector<32x96xbf16>
      %cst_38 = arith.constant dense<0.000000e+00> : vector<16x96xf32>
      %130 = tpu.matmul %128, %129, %cst_38 {dimension_numbers = #tpu.dot_dimension_numbers<[1], [0], [0], [1], [0, 0, 1, 1], [], []>} : vector<16x32xbf16>, vector<32x96xbf16>, vector<16x96xf32> -> vector<16x96xf32>
      %131 = arith.truncf %130 : vector<16x96xf32> to vector<16x96xbf16>
      %c0_39 = arith.constant 0 : index
      %c0_40 = arith.constant 0 : index
      %132 = vector.load %arg10[%c0_39, %c0_40] : memref<16x96xbf16, #tpu.memory_space<vmem>>, vector<16x96xbf16>
      tpu.vector_store %arg10[%c0_39, %c0_40], %131 {strides = array<i32>} : memref<16x96xbf16, #tpu.memory_space<vmem>>, vector<16x96xbf16>,
    } else {
    }
    %c0 = arith.constant 0 : index
    %c32 = arith.constant 32 : index
    %3 = vector.load %arg10[%c0, %c32] : memref<16x96xbf16, #tpu.memory_space<vmem>>, vector<16x32xbf16>
    %c0_1 = arith.constant 0 : index
    %c64 = arith.constant 64 : index
    %4 = vector.load %arg10[%c0_1, %c64] : memref<16x96xbf16, #tpu.memory_space<vmem>>, vector<16x32xbf16>
    %c8_i32 = arith.constant 8 : i32
    %5 = arith.muli %arg1, %c8_i32 : i32
    %6 = tpu.assume_multiple %5, 8 : i32
    %7 = arith.index_cast %6 : i32 to index
    %c0_2 = arith.constant 0 : index
    %8 = vector.load %arg10[%7, %c0_2] : memref<16x96xbf16, #tpu.memory_space<vmem>>, vector<8x32xbf16>
    %9 = arith.extf %8 : vector<8x32xbf16> to vector<8x32xf32>
    %c0_3 = arith.constant 0 : index
    %c0_4 = arith.constant 0 : index
    %10 = vector.load %arg6[%c0_3, %c0_4] : memref<4x32xf32, #tpu.memory_space<vmem>>, vector<4x32xf32>
    %c0_5 = arith.constant 0 : index
    %c0_6 = arith.constant 0 : index
    %11 = vector.load %arg7[%c0_5, %c0_6] : memref<4x32xf32, #tpu.memory_space<vmem>>, vector<4x32xf32>
    %12 = arith.extf %4 : vector<16x32xbf16> to vector<16x32xf32>
    %cst = arith.constant dense<0.000000e+00> : vector<32xf32>
    %13 = vector.multi_reduction <add>, %12, %cst [0] : vector<16x32xf32> to vector<32xf32>
    %14 = vector.shape_cast %13 : vector<32xf32> to vector<1x32xf32>
    %c0_7 = arith.constant 0 : index
    %c0_8 = arith.constant 0 : index
    %15 = vector.load %arg8[%c0_7, %c0_8] : memref<1x32xf32, #tpu.memory_space<vmem>>, vector<1x32xf32>
    %16 = arith.mulf %15, %14 : vector<1x32xf32>
    %17 = vector.extract_strided_slice %10 {offsets = [0, 0], sizes = [1, 32], strides = [1, 1]} : vector<4x32xf32> to vector<1x32xf32>
    %18 = vector.shape_cast %17 : vector<1x32xf32> to vector<32xf32>
    %19 = vector.shape_cast %18 : vector<32xf32> to vector<1x32xf32>
    %20 = vector.broadcast %19 : vector<1x32xf32> to vector<8x32xf32>
    %21 = arith.mulf %9, %20 : vector<8x32xf32>
    %22 = arith.truncf %21 : vector<8x32xf32> to vector<8x32xbf16>
    %cst_9 = arith.constant dense<0.000000e+00> : vector<8x16xf32>
    %23 = tpu.matmul %22, %3, %cst_9 {dimension_numbers = #tpu.dot_dimension_numbers<[1], [1], [0], [0], [0, 0, 1, 0], [], []>} : vector<8x32xbf16>, vector<16x32xbf16>, vector<8x16xf32> -> vector<8x16xf32>
    %cst_10 = arith.constant dense<0xFF800000> : vector<8xf32>
    %24 = vector.multi_reduction <maximumf>, %23, %cst_10 [1] : vector<8x16xf32> to vector<8xf32>
    %25 = vector.shape_cast %24 : vector<8xf32> to vector<8x1xf32>
    %26 = vector.broadcast %25 : vector<8x1xf32> to vector<8x16xf32>
    %27 = arith.subf %23, %26 : vector<8x16xf32>
    %28 = math.exp %27 : vector<8x16xf32>
    %cst_11 = arith.constant dense<0.000000e+00> : vector<8xf32>
    %29 = vector.multi_reduction <add>, %28, %cst_11 [1] : vector<8x16xf32> to vector<8xf32>
    %30 = vector.shape_cast %29 : vector<8xf32> to vector<8x1xf32>
    %31 = tpu.reciprocal %30 {approx = true} : vector<8x1xf32> -> vector<8x1xf32>
    %32 = vector.broadcast %31 : vector<8x1xf32> to vector<8x16xf32>
    %33 = arith.mulf %28, %32 : vector<8x16xf32>
    %34 = arith.truncf %33 : vector<8x16xf32> to vector<8x16xbf16>
    %cst_12 = arith.constant dense<0.000000e+00> : vector<8x32xf32>
    %35 = tpu.matmul %34, %4, %cst_12 {dimension_numbers = #tpu.dot_dimension_numbers<[1], [0], [0], [1], [0, 0, 1, 1], [], []>} : vector<8x16xbf16>, vector<16x32xbf16>, vector<8x32xf32> -> vector<8x32xf32>
    %36 = vector.extract_strided_slice %11 {offsets = [0, 0], sizes = [1, 32], strides = [1, 1]} : vector<4x32xf32> to vector<1x32xf32>
    %37 = vector.shape_cast %36 : vector<1x32xf32> to vector<32xf32>
    %38 = vector.shape_cast %37 : vector<32xf32> to vector<1x32xf32>
    %39 = vector.broadcast %38 : vector<1x32xf32> to vector<8x32xf32>
    %40 = arith.mulf %35, %39 : vector<8x32xf32>
    %41 = vector.broadcast %16 : vector<1x32xf32> to vector<8x32xf32>
    %42 = arith.addf %41, %40 : vector<8x32xf32>
    %43 = vector.extract_strided_slice %10 {offsets = [1, 0], sizes = [1, 32], strides = [1, 1]} : vector<4x32xf32> to vector<1x32xf32>
    %44 = vector.shape_cast %43 : vector<1x32xf32> to vector<32xf32>
    %45 = vector.shape_cast %44 : vector<32xf32> to vector<1x32xf32>
    %46 = vector.broadcast %45 : vector<1x32xf32> to vector<8x32xf32>
    %47 = arith.mulf %9, %46 : vector<8x32xf32>
    %48 = arith.truncf %47 : vector<8x32xf32> to vector<8x32xbf16>
    %cst_13 = arith.constant dense<0.000000e+00> : vector<8x16xf32>
    %49 = tpu.matmul %48, %3, %cst_13 {dimension_numbers = #tpu.dot_dimension_numbers<[1], [1], [0], [0], [0, 0, 1, 0], [], []>} : vector<8x32xbf16>, vector<16x32xbf16>, vector<8x16xf32> -> vector<8x16xf32>
    %cst_14 = arith.constant dense<0xFF800000> : vector<8xf32>
    %50 = vector.multi_reduction <maximumf>, %49, %cst_14 [1] : vector<8x16xf32> to vector<8xf32>
    %51 = vector.shape_cast %50 : vector<8xf32> to vector<8x1xf32>
    %52 = vector.broadcast %51 : vector<8x1xf32> to vector<8x16xf32>
    %53 = arith.subf %49, %52 : vector<8x16xf32>
    %54 = math.exp %53 : vector<8x16xf32>
    %cst_15 = arith.constant dense<0.000000e+00> : vector<8xf32>
    %55 = vector.multi_reduction <add>, %54, %cst_15 [1] : vector<8x16xf32> to vector<8xf32>
    %56 = vector.shape_cast %55 : vector<8xf32> to vector<8x1xf32>
    %57 = tpu.reciprocal %56 {approx = true} : vector<8x1xf32> -> vector<8x1xf32>
    %58 = vector.broadcast %57 : vector<8x1xf32> to vector<8x16xf32>
    %59 = arith.mulf %54, %58 : vector<8x16xf32>
    %60 = arith.truncf %59 : vector<8x16xf32> to vector<8x16xbf16>
    %cst_16 = arith.constant dense<0.000000e+00> : vector<8x32xf32>
    %61 = tpu.matmul %60, %4, %cst_16 {dimension_numbers = #tpu.dot_dimension_numbers<[1], [0], [0], [1], [0, 0, 1, 1], [], []>} : vector<8x16xbf16>, vector<16x32xbf16>, vector<8x32xf32> -> vector<8x32xf32>
    %62 = vector.extract_strided_slice %11 {offsets = [1, 0], sizes = [1, 32], strides = [1, 1]} : vector<4x32xf32> to vector<1x32xf32>
    %63 = vector.shape_cast %62 : vector<1x32xf32> to vector<32xf32>
    %64 = vector.shape_cast %63 : vector<32xf32> to vector<1x32xf32>
    %65 = vector.broadcast %64 : vector<1x32xf32> to vector<8x32xf32>
    %66 = arith.mulf %61, %65 : vector<8x32xf32>
    %67 = arith.addf %42, %66 : vector<8x32xf32>
    %68 = vector.extract_strided_slice %10 {offsets = [2, 0], sizes = [1, 32], strides = [1, 1]} : vector<4x32xf32> to vector<1x32xf32>
    %69 = vector.shape_cast %68 : vector<1x32xf32> to vector<32xf32>
    %70 = vector.shape_cast %69 : vector<32xf32> to vector<1x32xf32>
    %71 = vector.broadcast %70 : vector<1x32xf32> to vector<8x32xf32>
    %72 = arith.mulf %9, %71 : vector<8x32xf32>
    %73 = arith.truncf %72 : vector<8x32xf32> to vector<8x32xbf16>
    %cst_17 = arith.constant dense<0.000000e+00> : vector<8x16xf32>
    %74 = tpu.matmul %73, %3, %cst_17 {dimension_numbers = #tpu.dot_dimension_numbers<[1], [1], [0], [0], [0, 0, 1, 0], [], []>} : vector<8x32xbf16>, vector<16x32xbf16>, vector<8x16xf32> -> vector<8x16xf32>
    %cst_18 = arith.constant dense<0xFF800000> : vector<8xf32>
    %75 = vector.multi_reduction <maximumf>, %74, %cst_18 [1] : vector<8x16xf32> to vector<8xf32>
    %76 = vector.shape_cast %75 : vector<8xf32> to vector<8x1xf32>
    %77 = vector.broadcast %76 : vector<8x1xf32> to vector<8x16xf32>
    %78 = arith.subf %74, %77 : vector<8x16xf32>
    %79 = math.exp %78 : vector<8x16xf32>
    %cst_19 = arith.constant dense<0.000000e+00> : vector<8xf32>
    %80 = vector.multi_reduction <add>, %79, %cst_19 [1] : vector<8x16xf32> to vector<8xf32>
    %81 = vector.shape_cast %80 : vector<8xf32> to vector<8x1xf32>
    %82 = tpu.reciprocal %81 {approx = true} : vector<8x1xf32> -> vector<8x1xf32>
    %83 = vector.broadcast %82 : vector<8x1xf32> to vector<8x16xf32>
    %84 = arith.mulf %79, %83 : vector<8x16xf32>
    %85 = arith.truncf %84 : vector<8x16xf32> to vector<8x16xbf16>
    %cst_20 = arith.constant dense<0.000000e+00> : vector<8x32xf32>
    %86 = tpu.matmul %85, %4, %cst_20 {dimension_numbers = #tpu.dot_dimension_numbers<[1], [0], [0], [1], [0, 0, 1, 1], [], []>} : vector<8x16xbf16>, vector<16x32xbf16>, vector<8x32xf32> -> vector<8x32xf32>
    %87 = vector.extract_strided_slice %11 {offsets = [2, 0], sizes = [1, 32], strides = [1, 1]} : vector<4x32xf32> to vector<1x32xf32>
    %88 = vector.shape_cast %87 : vector<1x32xf32> to vector<32xf32>
    %89 = vector.shape_cast %88 : vector<32xf32> to vector<1x32xf32>
    %90 = vector.broadcast %89 : vector<1x32xf32> to vector<8x32xf32>
    %91 = arith.mulf %86, %90 : vector<8x32xf32>
    %92 = arith.addf %67, %91 : vector<8x32xf32>
    %93 = vector.extract_strided_slice %10 {offsets = [3, 0], sizes = [1, 32], strides = [1, 1]} : vector<4x32xf32> to vector<1x32xf32>
    %94 = vector.shape_cast %93 : vector<1x32xf32> to vector<32xf32>
    %95 = vector.shape_cast %94 : vector<32xf32> to vector<1x32xf32>
    %96 = vector.broadcast %95 : vector<1x32xf32> to vector<8x32xf32>
    %97 = arith.mulf %9, %96 : vector<8x32xf32>
    %98 = arith.truncf %97 : vector<8x32xf32> to vector<8x32xbf16>
    %cst_21 = arith.constant dense<0.000000e+00> : vector<8x16xf32>
    %99 = tpu.matmul %98, %3, %cst_21 {dimension_numbers = #tpu.dot_dimension_numbers<[1], [1], [0], [0], [0, 0, 1, 0], [], []>} : vector<8x32xbf16>, vector<16x32xbf16>, vector<8x16xf32> -> vector<8x16xf32>
    %cst_22 = arith.constant dense<0xFF800000> : vector<8xf32>
    %100 = vector.multi_reduction <maximumf>, %99, %cst_22 [1] : vector<8x16xf32> to vector<8xf32>
    %101 = vector.shape_cast %100 : vector<8xf32> to vector<8x1xf32>
    %102 = vector.broadcast %101 : vector<8x1xf32> to vector<8x16xf32>
    %103 = arith.subf %99, %102 : vector<8x16xf32>
    %104 = math.exp %103 : vector<8x16xf32>
    %cst_23 = arith.constant dense<0.000000e+00> : vector<8xf32>
    %105 = vector.multi_reduction <add>, %104, %cst_23 [1] : vector<8x16xf32> to vector<8xf32>
    %106 = vector.shape_cast %105 : vector<8xf32> to vector<8x1xf32>
    %107 = tpu.reciprocal %106 {approx = true} : vector<8x1xf32> -> vector<8x1xf32>
    %108 = vector.broadcast %107 : vector<8x1xf32> to vector<8x16xf32>
    %109 = arith.mulf %104, %108 : vector<8x16xf32>
    %110 = arith.truncf %109 : vector<8x16xf32> to vector<8x16xbf16>
    %cst_24 = arith.constant dense<0.000000e+00> : vector<8x32xf32>
    %111 = tpu.matmul %110, %4, %cst_24 {dimension_numbers = #tpu.dot_dimension_numbers<[1], [0], [0], [1], [0, 0, 1, 1], [], []>} : vector<8x16xbf16>, vector<16x32xbf16>, vector<8x32xf32> -> vector<8x32xf32>
    %112 = vector.extract_strided_slice %11 {offsets = [3, 0], sizes = [1, 32], strides = [1, 1]} : vector<4x32xf32> to vector<1x32xf32>
    %113 = vector.shape_cast %112 : vector<1x32xf32> to vector<32xf32>
    %114 = vector.shape_cast %113 : vector<32xf32> to vector<1x32xf32>
    %115 = vector.broadcast %114 : vector<1x32xf32> to vector<8x32xf32>
    %116 = arith.mulf %111, %115 : vector<8x32xf32>
    %117 = arith.addf %92, %116 : vector<8x32xf32>
    %118 = arith.truncf %117 : vector<8x32xf32> to vector<8x32xbf16>
    %c0_25 = arith.constant 0 : index
    %c0_26 = arith.constant 0 : index
    %119 = vector.load %arg4[%c0_25, %c0_26] : memref<32x32xbf16, #tpu.memory_space<vmem>>, vector<32x32xbf16>
    %cst_27 = arith.constant dense<0.000000e+00> : vector<8x32xf32>
    %120 = tpu.matmul %118, %119, %cst_27 {dimension_numbers = #tpu.dot_dimension_numbers<[1], [0], [0], [1], [0, 0, 1, 1], [], []>} : vector<8x32xbf16>, vector<32x32xbf16>, vector<8x32xf32> -> vector<8x32xf32>
    %c0_28 = arith.constant 0 : index
    %c0_29 = arith.constant 0 : index
    %121 = vector.load %arg5[%c0_28, %c0_29] : memref<1x32xf32, #tpu.memory_space<vmem>>, vector<1x32xf32>
    %122 = vector.broadcast %121 : vector<1x32xf32> to vector<8x32xf32>
    %123 = arith.addf %120, %122 : vector<8x32xf32>
    %c0_30 = arith.constant 0 : index
    %c0_31 = arith.constant 0 : index
    %c0_32 = arith.constant 0 : index
    %124 = vector.load %arg9[%c0_30, %c0_31, %c0_32] : memref<1x8x32xf32, #tpu.memory_space<vmem>>, vector<1x8x32xf32>
    %125 = vector.shape_cast %124 : vector<1x8x32xf32> to vector<8x32xf32>
    %126 = vector.shape_cast %123 : vector<8x32xf32> to vector<1x8x32xf32>
    tpu.vector_store %arg9[%c0_30, %c0_31, %c0_32], %126 {strides = array<i32>} : memref<1x8x32xf32, #tpu.memory_space<vmem>>, vector<1x8x32xf32>,
    return
  }
  func.func @transform_0(%arg0: i32, %arg1: i32) -> (i32, i32, i32) {
    %c0_i32 = arith.constant 0 : i32
    %c0_i32_0 = arith.constant 0 : i32
    %c0_i32_1 = arith.constant 0 : i32
    return %arg0, %c0_i32, %c0_i32_0 : i32, i32, i32
  }
  func.func @transform_1(%arg0: i32, %arg1: i32) -> (i32, i32) {
    %c0_i32 = arith.constant 0 : i32
    %c0_i32_0 = arith.constant 0 : i32
    %c0_i32_1 = arith.constant 0 : i32
    return %c0_i32, %c0_i32_0 : i32, i32
  }
  func.func @transform_2(%arg0: i32, %arg1: i32) -> (i32, i32) {
    %c0_i32 = arith.constant 0 : i32
    %c0_i32_0 = arith.constant 0 : i32
    %c0_i32_1 = arith.constant 0 : i32
    return %c0_i32, %c0_i32_0 : i32, i32
  }
  func.func @transform_3(%arg0: i32, %arg1: i32) -> (i32, i32) {
    %c0_i32 = arith.constant 0 : i32
    %c0_i32_0 = arith.constant 0 : i32
    %c0_i32_1 = arith.constant 0 : i32
    return %c0_i32, %c0_i32_0 : i32, i32
  }
  func.func @transform_4(%arg0: i32, %arg1: i32) -> (i32, i32) {
    %c0_i32 = arith.constant 0 : i32
    %c0_i32_0 = arith.constant 0 : i32
    %c0_i32_1 = arith.constant 0 : i32
    return %c0_i32, %c0_i32_0 : i32, i32
  }
  func.func @transform_5(%arg0: i32, %arg1: i32) -> (i32, i32) {
    %c0_i32 = arith.constant 0 : i32
    %c0_i32_0 = arith.constant 0 : i32
    %c0_i32_1 = arith.constant 0 : i32
    return %c0_i32, %c0_i32_0 : i32, i32
  }
  func.func @transform_6(%arg0: i32, %arg1: i32) -> (i32, i32) {
    %c0_i32 = arith.constant 0 : i32
    %c0_i32_0 = arith.constant 0 : i32
    %c0_i32_1 = arith.constant 0 : i32
    return %c0_i32, %c0_i32_0 : i32, i32
  }
  func.func @transform_7(%arg0: i32, %arg1: i32) -> (i32, i32, i32) {
    %c0_i32 = arith.constant 0 : i32
    %c0_i32_0 = arith.constant 0 : i32
    return %arg0, %arg1, %c0_i32 : i32, i32, i32
  }
}

</mosaic_0001>

<llo_original>
// kernel: tpu_custom_call.1
$region0: #{tpu_custom_call.1}
  #allocation0 [shape = 'u32[]', space=smem, size = 0x4, offset = 0x4, fixed_abs, tag = 'smem constant byte address 0x4 - core index']
  #allocation1 [shape = 'u32[72,128]{1,0:T(1,128)}', space=vmem, size = 0x9000, scoped, tag = 'internal scratch']
  #allocation2 [shape = 'bf16[16,96]{1,0:T(8,128)(2,1)}', space=vmem, size = 0x1000, scoped, tag = 'scratch operand']
  %s0 = inlined_call_operand.hbm [shape: bf16[2,16,32], index: 0, kind: input, shape index: {}]
  %s1 = inlined_call_operand.hbm [shape: bf16[32,96], index: 1, kind: input, shape index: {}]
  %s2 = inlined_call_operand.hbm [shape: bf16[32,32], index: 2, kind: input, shape index: {}]
  %s3 = inlined_call_operand.hbm [shape: f32[1,32], index: 3, kind: input, shape index: {}]
  %s4 = inlined_call_operand.hbm [shape: f32[4,32], index: 4, kind: input, shape index: {}]
  %s5 = inlined_call_operand.vmem [shape: f32[4,32], index: 5, kind: input, shape index: {}]
  %s6 = inlined_call_operand.vmem [shape: f32[1,32], index: 6, kind: input, shape index: {}]
  %s7 = inlined_call_operand.hbm [shape: f32[2,16,32], index: 7, kind: output, shape index: {}]
  %s8 = sld [smem:[#allocation0]]
  $region85: #{tpu_custom_call.1} parent=0
    _
  %s10 = ssub.s32 1, %s8
  %s11 = scalar_select 0, %s10, %s8
  $region1: #{tpu_custom_call.1} parent=0
    #allocation3 [shape = 'u8[8192]{0}', space=vmem, size = 0x2000, scoped, tag = 'input window, operand 0']
    #allocation4 [shape = 's32[2]{0}', space=sflag, size = 0x8, scoped, tag = 'scoped memory for tpu_custom_call.1']
    #allocation5 [shape = 's32[2]{0}', space=sflag, size = 0x8, scoped, tag = 'scoped memory for tpu_custom_call.1']
    #allocation6 [shape = 'u8[8192]{0}', space=vmem, size = 0x2000, scoped, tag = 'input window, operand 1, single buffered']
    #allocation7 [shape = 's32[1]{0}', space=sflag, size = 0x4, scoped, tag = 'scoped memory for tpu_custom_call.1']
    #allocation8 [shape = 'u8[8192]{0}', space=vmem, size = 0x2000, scoped, tag = 'input window, operand 2, single buffered']
    #allocation9 [shape = 'u8[512]{0}', space=vmem, size = 0x400, scoped, tag = 'input window, operand 3, single buffered']
    #allocation10 [shape = 's32[1]{0}', space=sflag, size = 0x4, scoped, tag = 'scoped memory for tpu_custom_call.1']
    #allocation11 [shape = 'u8[2048]{0}', space=vmem, size = 0x800, scoped, tag = 'input window, operand 4, single buffered']
    #allocation12 [shape = 'u8[8192]{0}', space=vmem, size = 0x2000, scoped, tag = 'output window, operand 0']
    %12 = vsyncpa [#allocation4], 0
    %s13 = scalar_lea.sflag [#allocation4], 1
    %14 = vsyncpa %s13, 0
    %15 = vsyncpa [#allocation7], 0
    %16 = vsyncpa [#allocation10], 0
    %17 = vsyncpa [#allocation5], 0
    %s18 = scalar_lea.sflag [#allocation5], 1
    %19 = vsyncpa %s18, 0
    loop: start=0, step=1, limit=6
    $region2: #{tpu_custom_call.1} parent=1 // loop_pre_header
      _
    $region3: #{tpu_custom_call.1} parent=1 // loop_header
      %s21 = sphi 0, %s25
      %p22 = scmp.ge.s32.totalorder %s21, 6
      %s28 = sphi 0, %s40
      %s29 = sphi 0, %s36
      %s30 = sphi 0, %s28
      %s31 = sphi 0, %s29
      %s32 = sphi 0, %s30
      %s33 = sphi 0, %s31
      %s43 = sphi 0, %s45
      %s46 = sphi 0, %s43
      %s47 = sphi 0, %s46
      %s63 = sphi 0, %s47
      %s67 = sphi 0, %s67
      %s69 = sphi 0, %s67
      %s70 = sphi 0, %s69
      %s84 = sphi 0, %s70
      %s88 = sphi 0, %s88
      %s90 = sphi 0, %s88
      %s91 = sphi 0, %s90
      %s105 = sphi 0, %s91
      %s109 = sphi 0, %s109
      %s111 = sphi 0, %s109
      %s112 = sphi 0, %s111
      %s126 = sphi 0, %s112
      %s130 = sphi 0, %s130
      %s132 = sphi 0, %s130
      %s133 = sphi 0, %s132
      %s147 = sphi 0, %s133
      %s151 = sphi 0, %s151
      %s153 = sphi 0, %s151
      %s154 = sphi 0, %s153
      %s168 = sphi 0, %s154
      %s172 = sphi 0, %s172
      %s174 = sphi 0, %s172
      %s175 = sphi 0, %s174
      %s189 = sphi 0, %s175
      %s197 = sphi 0, %s199
      %s200 = sphi 0, %s197
      %s201 = sphi 0, %s200
      %s217 = sphi 0, %s201
    $region4: #{tpu_custom_call.1} parent=1 // loop_header_branch
      %24 = sbr.rel (%p22) target = $region8
    $region5: #{tpu_custom_call.1} parent=1 // loop_body
      %s26 = ssub.s32 %s21, 1
      %s27 = ssub.s32 %s21, 2
      %s34 = sadd.s32 1, %s29
      %p35 = scmp.ge.s32.totalorder %s34, 2
      %s36 = scalar_select %p35, 0, %s34
      %s37 = sadd.s32 1, %s28
      %s38 = scalar_select %p35, %s37, %s28
      %p39 = scmp.ge.s32.totalorder %s38, 2
      %s40 = scalar_select %p39, 0, %s38
      %s41 = ssub.s32 %s28, %s40
      %p42 = scmp.eq.s32.totalorder %s41, 0
      %s44 = sadd.s32 %s43, 1
      %s45 = scalar_select %p42, %s43, %s44
      %p48 = pneg %p42
      %p49 = scmp.eq.s32.totalorder %s21, 3
      %p50 = por %p48, %p49
      %p51 = scmp.ne.s32.totalorder %s43, %s46
      %p52 = scmp.eq.s32.totalorder %s21, 0
      %p53 = por %p51, %p52
      %p54 = scmp.ne.s32.totalorder %s43, %s46
      %p55 = scmp.eq.s32.totalorder %s26, 3
      %p56 = por %p54, %p55
      %p57 = scmp.ne.s32.totalorder %s46, %s47
      %p58 = scmp.eq.s32.totalorder %s26, 0
      %p59 = por %p57, %p58
      %p60 = scmp.ne.s32.totalorder %s46, %s47
      %p61 = scmp.eq.s32.totalorder %s27, 3
      %p62 = por %p60, %p61
      %p64 = scmp.ne.s32.totalorder %s47, %s63
      %p65 = scmp.eq.s32.totalorder %s27, 0
      %p66 = por %p64, %p65
      %s68 = sadd.s32 %s67, 1
      %p71 = scmp.eq.s32.totalorder %s21, 3
      %p72 = scmp.ne.s32.totalorder %s67, %s69
      %p73 = scmp.eq.s32.totalorder %s21, 0
      %p74 = por %p72, %p73
      %p75 = scmp.ne.s32.totalorder %s67, %s69
      %p76 = scmp.eq.s32.totalorder %s26, 3
      %p77 = por %p75, %p76
      %p78 = scmp.ne.s32.totalorder %s69, %s70
      %p79 = scmp.eq.s32.totalorder %s26, 0
      %p80 = por %p78, %p79
      %p81 = scmp.ne.s32.totalorder %s69, %s70
      %p82 = scmp.eq.s32.totalorder %s27, 3
      %p83 = por %p81, %p82
      %p85 = scmp.ne.s32.totalorder %s70, %s84
      %p86 = scmp.eq.s32.totalorder %s27, 0
      %p87 = por %p85, %p86
      %s89 = sadd.s32 %s88, 1
      %p92 = scmp.eq.s32.totalorder %s21, 3
      %p93 = scmp.ne.s32.totalorder %s88, %s90
      %p94 = scmp.eq.s32.totalorder %s21, 0
      %p95 = por %p93, %p94
      %p96 = scmp.ne.s32.totalorder %s88, %s90
      %p97 = scmp.eq.s32.totalorder %s26, 3
      %p98 = por %p96, %p97
      %p99 = scmp.ne.s32.totalorder %s90, %s91
      %p100 = scmp.eq.s32.totalorder %s26, 0
      %p101 = por %p99, %p100
      %p102 = scmp.ne.s32.totalorder %s90, %s91
      %p103 = scmp.eq.s32.totalorder %s27, 3
      %p104 = por %p102, %p103
      %p106 = scmp.ne.s32.totalorder %s91, %s105
      %p107 = scmp.eq.s32.totalorder %s27, 0
      %p108 = por %p106, %p107
      %s110 = sadd.s32 %s109, 1
      %p113 = scmp.eq.s32.totalorder %s21, 3
      %p114 = scmp.ne.s32.totalorder %s109, %s111
      %p115 = scmp.eq.s32.totalorder %s21, 0
      %p116 = por %p114, %p115
      %p117 = scmp.ne.s32.totalorder %s109, %s111
      %p118 = scmp.eq.s32.totalorder %s26, 3
      %p119 = por %p117, %p118
      %p120 = scmp.ne.s32.totalorder %s111, %s112
      %p121 = scmp.eq.s32.totalorder %s26, 0
      %p122 = por %p120, %p121
      %p123 = scmp.ne.s32.totalorder %s111, %s112
      %p124 = scmp.eq.s32.totalorder %s27, 3
      %p125 = por %p123, %p124
      %p127 = scmp.ne.s32.totalorder %s112, %s126
      %p128 = scmp.eq.s32.totalorder %s27, 0
      %p129 = por %p127, %p128
      %s131 = sadd.s32 %s130, 1
      %p134 = scmp.eq.s32.totalorder %s21, 3
      %p135 = scmp.ne.s32.totalorder %s130, %s132
      %p136 = scmp.eq.s32.totalorder %s21, 0
      %p137 = por %p135, %p136
      %p138 = scmp.ne.s32.totalorder %s130, %s132
      %p139 = scmp.eq.s32.totalorder %s26, 3
      %p140 = por %p138, %p139
      %p141 = scmp.ne.s32.totalorder %s132, %s133
      %p142 = scmp.eq.s32.totalorder %s26, 0
      %p143 = por %p141, %p142
      %p144 = scmp.ne.s32.totalorder %s132, %s133
      %p145 = scmp.eq.s32.totalorder %s27, 3
      %p146 = por %p144, %p145
      %p148 = scmp.ne.s32.totalorder %s133, %s147
      %p149 = scmp.eq.s32.totalorder %s27, 0
      %p150 = por %p148, %p149
      %s152 = sadd.s32 %s151, 1
      %p155 = scmp.eq.s32.totalorder %s21, 3
      %p156 = scmp.ne.s32.totalorder %s151, %s153
      %p157 = scmp.eq.s32.totalorder %s21, 0
      %p158 = por %p156, %p157
      %p159 = scmp.ne.s32.totalorder %s151, %s153
      %p160 = scmp.eq.s32.totalorder %s26, 3
      %p161 = por %p159, %p160
      %p162 = scmp.ne.s32.totalorder %s153, %s154
      %p163 = scmp.eq.s32.totalorder %s26, 0
      %p164 = por %p162, %p163
      %p165 = scmp.ne.s32.totalorder %s153, %s154
      %p166 = scmp.eq.s32.totalorder %s27, 3
      %p167 = por %p165, %p166
      %p169 = scmp.ne.s32.totalorder %s154, %s168
      %p170 = scmp.eq.s32.totalorder %s27, 0
      %p171 = por %p169, %p170
      %s173 = sadd.s32 %s172, 1
      %p176 = scmp.eq.s32.totalorder %s21, 3
      %p177 = scmp.ne.s32.totalorder %s172, %s174
      %p178 = scmp.eq.s32.totalorder %s21, 0
      %p179 = por %p177, %p178
      %p180 = scmp.ne.s32.totalorder %s172, %s174
      %p181 = scmp.eq.s32.totalorder %s26, 3
      %p182 = por %p180, %p181
      %p183 = scmp.ne.s32.totalorder %s174, %s175
      %p184 = scmp.eq.s32.totalorder %s26, 0
      %p185 = por %p183, %p184
      %p186 = scmp.ne.s32.totalorder %s174, %s175
      %p187 = scmp.eq.s32.totalorder %s27, 3
      %p188 = por %p186, %p187
      %p190 = scmp.ne.s32.totalorder %s175, %s189
      %p191 = scmp.eq.s32.totalorder %s27, 0
      %p192 = por %p190, %p191
      %s193 = ssub.s32 %s28, %s40
      %s194 = ssub.s32 %s29, %s36
      %s195 = sor.u32 %s193, %s194
      %p196 = scmp.eq.s32.totalorder %s195, 0
      %s198 = sadd.s32 %s197, 1
      %s199 = scalar_select %p196, %s197, %s198
      %p202 = pneg %p196
      %p203 = scmp.eq.s32.totalorder %s21, 3
      %p204 = por %p202, %p203
      %p205 = scmp.ne.s32.totalorder %s197, %s200
      %p206 = scmp.eq.s32.totalorder %s21, 0
      %p207 = por %p205, %p206
      %p208 = scmp.ne.s32.totalorder %s197, %s200
      %p209 = scmp.eq.s32.totalorder %s26, 3
      %p210 = por %p208, %p209
      %p211 = scmp.ne.s32.totalorder %s200, %s201
      %p212 = scmp.eq.s32.totalorder %s26, 0
      %p213 = por %p211, %p212
      %p214 = scmp.ne.s32.totalorder %s200, %s201
      %p215 = scmp.eq.s32.totalorder %s27, 3
      %p216 = por %p214, %p215
      %p218 = scmp.ne.s32.totalorder %s201, %s217
      %p219 = scmp.eq.s32.totalorder %s27, 0
      %p220 = por %p218, %p219
      %p221 = scmp.le.s32.totalorder 1, %s21
      %p222 = scmp.lt.s32.totalorder %s21, 5
      %p223 = pnand %p221, %p222
      %p224 = pneg %p223
      // Predicated region
      $region9: #{tpu_custom_call.1} parent=5 // pred_check
        _
      $region10: #{tpu_custom_call.1} parent=5 // pred_check_branch
        %226 = sbr.rel (%p223) target = $region12
      $region11: #{tpu_custom_call.1} parent=5 // pred_region
        %s227 = ssub.s32 %s21, 1
        // Predicated region
        $region13: #{tpu_custom_call.1} parent=11 // pred_check
          %p228 = pneg %p80
        $region14: #{tpu_custom_call.1} parent=11 // pred_check_branch
          %230 = sbr.rel (%p228) target = $region16
        $region15: #{tpu_custom_call.1} parent=11 // pred_region
          %232 = vsyncadd [#allocation7], 0
          %s233 = sshll.u32 %s1, 4
          %s234 = int_to_ptr.hbm [resolvable:$true] %s233
          %s235 = sshll.u32 [#allocation6], 4
          %s236 = int_to_ptr.vmem [resolvable:$true] %s235
          %241 = dma.hbm_to_vmem [thread:$0]  %s234, 256, %s236, [#allocation7], 64, 64, 4
        $region16: #{tpu_custom_call.1} parent=11 // pred_fallthru
          _
        // Predicated region
        $region17: #{tpu_custom_call.1} parent=11 // pred_check
          %p242 = pneg %p101
        $region18: #{tpu_custom_call.1} parent=11 // pred_check_branch
          %244 = sbr.rel (%p242) target = $region20
        $region19: #{tpu_custom_call.1} parent=11 // pred_region
          %246 = vsyncadd [#allocation7], 0
          %s247 = sshll.u32 %s2, 4
          %s248 = int_to_ptr.hbm [resolvable:$true] %s247
          %s249 = sshll.u32 [#allocation8], 4
          %s250 = int_to_ptr.vmem [resolvable:$true] %s249
          %255 = dma.hbm_to_vmem [thread:$0]  %s248, 256, %s250, [#allocation7], 64, 64, 4
        $region20: #{tpu_custom_call.1} parent=11 // pred_fallthru
          _
        // Predicated region
        $region21: #{tpu_custom_call.1} parent=11 // pred_check
          %p256 = pneg %p122
        $region22: #{tpu_custom_call.1} parent=11 // pred_check_branch
          %258 = sbr.rel (%p256) target = $region24
        $region23: #{tpu_custom_call.1} parent=11 // pred_region
          %260 = vsyncadd [#allocation10], 0
          %s262 = sshll.u32 %s3, 4
          %s263 = int_to_ptr.hbm [resolvable:$true] %s262
          %s264 = sshll.u32 [#allocation9], 4
          %s265 = int_to_ptr.vmem [resolvable:$true] %s264
          %267 = dma.hbm_to_vmem [thread:$0]  %s263, 16, %s265, [#allocation10]
        $region24: #{tpu_custom_call.1} parent=11 // pred_fallthru
          _
        // Predicated region
        $region25: #{tpu_custom_call.1} parent=11 // pred_check
          %p268 = pneg %p143
        $region26: #{tpu_custom_call.1} parent=11 // pred_check_branch
          %270 = sbr.rel (%p268) target = $region28
        $region27: #{tpu_custom_call.1} parent=11 // pred_region
          %272 = vsyncadd [#allocation10], 0
          %s274 = sshll.u32 %s4, 4
          %s275 = int_to_ptr.hbm [resolvable:$true] %s274
          %s276 = sshll.u32 [#allocation11], 4
          %s277 = int_to_ptr.vmem [resolvable:$true] %s276
          %279 = dma.hbm_to_vmem [thread:$0]  %s275, 64, %s277, [#allocation10]
        $region28: #{tpu_custom_call.1} parent=11 // pred_fallthru
          _
        // Predicated region
        $region29: #{tpu_custom_call.1} parent=11 // pred_check
          %p280 = pneg %p164
        $region30: #{tpu_custom_call.1} parent=11 // pred_check_branch
          %282 = sbr.rel (%p280) target = $region32
        $region31: #{tpu_custom_call.1} parent=11 // pred_region
          _
        $region32: #{tpu_custom_call.1} parent=11 // pred_fallthru
          _
        // Predicated region
        $region33: #{tpu_custom_call.1} parent=11 // pred_check
          %p283 = pneg %p185
        $region34: #{tpu_custom_call.1} parent=11 // pred_check_branch
          %285 = sbr.rel (%p283) target = $region36
        $region35: #{tpu_custom_call.1} parent=11 // pred_region
          _
        $region36: #{tpu_custom_call.1} parent=11 // pred_fallthru
          _
      $region12: #{tpu_custom_call.1} parent=5 // pred_fallthru
        _
      %p286 = scmp.lt.s32.totalorder %s21, 4
      // Predicated region
      $region37: #{tpu_custom_call.1} parent=5 // pred_check
        %p287 = pneg %p286
      $region38: #{tpu_custom_call.1} parent=5 // pred_check_branch
        %289 = sbr.rel (%p287) target = $region40
      $region39: #{tpu_custom_call.1} parent=5 // pred_region
        // Predicated region
        $region41: #{tpu_custom_call.1} parent=39 // pred_check
          %p290 = pneg %p53
        $region42: #{tpu_custom_call.1} parent=39 // pred_check_branch
          %292 = sbr.rel (%p290) target = $region44
        $region43: #{tpu_custom_call.1} parent=39 // pred_region
          %s293 = sand.u32 %s43, 1
          %s294 = scalar_lea.sflag [#allocation4], %s293
          %s295 = sand.u32 %s43, 1
          %s296 = smul.addr %s295, 8
          %s297 = scalar_lea.vmem [#allocation3], %s296
          %299 = vsyncadd %s294, 0
          %s300 = smul.addr %s28, 2
          %s301 = smul.addr %s300, 4
          %s302 = scalar_lea.hbm %s0, %s301
          %s303 = sshll.u32 %s302, 4
          %s304 = int_to_ptr.hbm [resolvable:$true] %s303
          %s305 = sshll.u32 %s297, 4
          %s306 = int_to_ptr.vmem [resolvable:$true] %s305
          %311 = dma.hbm_to_vmem [thread:$0]  %s304, 128, %s306, %s294, 64, 64, 4
        $region44: #{tpu_custom_call.1} parent=39 // pred_fallthru
          _
      $region40: #{tpu_custom_call.1} parent=5 // pred_fallthru
        _
      %p312 = scmp.le.s32.totalorder 1, %s21
      %p313 = scmp.lt.s32.totalorder %s21, 5
      %p314 = pnand %p312, %p313
      %p315 = pneg %p314
      // Predicated region
      $region45: #{tpu_custom_call.1} parent=5 // pred_check
        _
      $region46: #{tpu_custom_call.1} parent=5 // pred_check_branch
        %317 = sbr.rel (%p314) target = $region48
      $region47: #{tpu_custom_call.1} parent=5 // pred_region
        %s318 = ssub.s32 %s21, 1
        %s319 = sand.u32 %s46, 1
        %s320 = scalar_lea.sflag [#allocation4], %s319
        %s321 = sand.u32 %s46, 1
        %s322 = smul.addr %s321, 8
        %s323 = scalar_lea.vmem [#allocation3], %s322
        // Predicated region
        $region49: #{tpu_custom_call.1} parent=47 // pred_check
          %p324 = pneg %p59
        $region50: #{tpu_custom_call.1} parent=47 // pred_check_branch
          %326 = sbr.rel (%p324) target = $region52
        $region51: #{tpu_custom_call.1} parent=47 // pred_region
          %328 = dma.done %s320, 128
        $region52: #{tpu_custom_call.1} parent=47 // pred_fallthru
          _
        // Predicated region
        $region53: #{tpu_custom_call.1} parent=47 // pred_check
          %p329 = pneg %p80
        $region54: #{tpu_custom_call.1} parent=47 // pred_check_branch
          %331 = sbr.rel (%p329) target = $region56
        $region55: #{tpu_custom_call.1} parent=47 // pred_region
          %333 = dma.done [#allocation7], 256
        $region56: #{tpu_custom_call.1} parent=47 // pred_fallthru
          _
        // Predicated region
        $region57: #{tpu_custom_call.1} parent=47 // pred_check
          %p334 = pneg %p101
        $region58: #{tpu_custom_call.1} parent=47 // pred_check_branch
          %336 = sbr.rel (%p334) target = $region60
        $region59: #{tpu_custom_call.1} parent=47 // pred_region
          %338 = dma.done [#allocation7], 256
        $region60: #{tpu_custom_call.1} parent=47 // pred_fallthru
          _
        // Predicated region
        $region61: #{tpu_custom_call.1} parent=47 // pred_check
          %p339 = pneg %p122
        $region62: #{tpu_custom_call.1} parent=47 // pred_check_branch
          %341 = sbr.rel (%p339) target = $region64
        $region63: #{tpu_custom_call.1} parent=47 // pred_region
          %343 = dma.done [#allocation10], 16
        $region64: #{tpu_custom_call.1} parent=47 // pred_fallthru
          _
        // Predicated region
        $region65: #{tpu_custom_call.1} parent=47 // pred_check
          %p344 = pneg %p143
        $region66: #{tpu_custom_call.1} parent=47 // pred_check_branch
          %346 = sbr.rel (%p344) target = $region68
        $region67: #{tpu_custom_call.1} parent=47 // pred_region
          %348 = dma.done [#allocation10], 64
        $region68: #{tpu_custom_call.1} parent=47 // pred_fallthru
          _
        %s349 = sand.u32 %s46, 1
        %s350 = scalar_lea.sflag [#allocation4], %s349
        %s351 = sand.u32 %s46, 1
        %s352 = smul.addr %s351, 8
        %s353 = scalar_lea.vmem [#allocation3], %s352
        %p354 = pneg %p59
        %p355 = pneg %p56
        %p356 = pneg %p80
        %p357 = pneg %p77
        %p358 = pneg %p101
        %p359 = pneg %p98
        %p360 = pneg %p122
        %p361 = pneg %p119
        %p362 = pneg %p143
        %p363 = pneg %p140
        %p364 = pneg %p164
        %p365 = pneg %p161
        %p366 = pneg %p185
        %p367 = pneg %p182
        %p368 = pneg %p213
        %p369 = pneg %p210
        %s370 = sand.u32 %s200, 1
        %s371 = scalar_lea.sflag [#allocation5], %s370
        %s372 = sand.u32 %s200, 1
        %s373 = smul.addr %s372, 8
        %s374 = scalar_lea.vmem [#allocation12], %s373
        %p376 = scmp.eq.s32.totalorder %s31, 0
        // Predicated region
        $region69: #{tpu_custom_call.1} parent=47 // pred_check
          %p377 = pneg %p376
        $region70: #{tpu_custom_call.1} parent=47 // pred_check_branch
          %379 = sbr.rel (%p377) target = $region72
        $region71: #{tpu_custom_call.1} parent=47 // pred_region
          %v380 = vld [vmem:[%s323] sm:$0xf]
          %v381 = vld [vmem:[%s323 + $0x4] sm:$0xf]
          %v382 = vld [vmem:[#allocation6] sm:$0xf]
          %v383 = vld [vmem:[#allocation6 + $0x4] sm:$0xf]
          %v384 = vld [vmem:[#allocation6 + $0x8] sm:$0xf]
          %v385 = vld [vmem:[#allocation6 + $0xc] sm:$0xf]
          %v388 = vunpack.c.l.b16 %v380
          %v389 = vunpack.c.l.b16 %v381
          %v390 = vpack.c.b16 %v389, %v388
          %v395 = vunpack.c.l.b16 %v382
          %v396 = vunpack.c.l.b16 %v383
          %v397 = vunpack.c.l.b16 %v384
          %v398 = vunpack.c.l.b16 %v385
          %v399 = vpack.c.b16 %v396, %v395
          %v400 = vpack.c.b16 %v398, %v397
          %vm403 = vcmask 261120
          %v405 = vsel %vm403, %v390, 0
          %407 = vmatpush.bf16.msra.mxu0 0
          %408 = vmatpush.bf16.msra.mxu0 0
          %409 = vmatpush.bf16.msra.mxu0 0
          %410 = vmatpush.bf16.msra.mxu0 0
          %411 = vmatpush.bf16.msra.mxu0 0
          %412 = vmatpush.bf16.msra.mxu0 0
          %413 = vmatpush.bf16.msra.mxu0 %v400
          %414 = vmatpush.bf16.msra.mxu0 %v399
          %415 = vmatmul.bf16.gmra.mxu0 %v405
          %v416 = vpop.f32.mrf.mxu0
          %v417 = vadd.f32 0.0, %v416
          %v418 = vpop.f32.mrf.mxu0
          %v419 = vadd.f32 0.0, %v418
          %420 = vdwg.mxu0
          %v421 = vpack.c.bf16 %v417, %v417
          %v422 = vpack.c.bf16 %v419, %v419
          %vm423 = vcmask 781312
          %424 = vst.msk [vmem:[#allocation2] sm:$0xf] %vm423, %v421
          %425 = vst.msk [vmem:[#allocation2 + $0x4] sm:$0xf] %vm423, %v422
        $region72: #{tpu_custom_call.1} parent=47 // pred_fallthru
          _
        %v426 = vld [vmem:[#allocation2] sm:$0xf]
        %v427 = vld [vmem:[#allocation2 + $0x4] sm:$0xf]
        %s428 = smul.u32 %s31, 8
        %s429 = sshra.s32 %s428, 3
        %s430 = sand.u32 %s428, 7
        %s431 = smul.addr %s429, 4
        %s432 = scalar_lea.vmem [#allocation2], %s431
        %v433 = vld [vmem:[%s432] sm:$0xf]
        %v434 = vunpack.c.l.bf16 %v433
        %v435 = vld [vmem:[#allocation11] sm:$0xf]
        %v436 = vld [vmem:[%s5] sm:$0xf]
        %v437 = vunpack.c.l.bf16 %v426
        %v438 = vunpack.c.l.bf16 %v427
        %vm439 = vcmask 785920
        %v440 = vsel %vm439, %v437, 0.0
        %v441 = vsel %vm439, %v438, 0.0
        %v442 = vadd.f32 %v440, %v441
        %v443 = vrot.slane %v442, 4
        %v444 = vadd.f32 %v442, %v443
        %v445 = vrot.slane %v444, 2
        %v446 = vadd.f32 %v444, %v445
        %v447 = vrot.slane %v446, 1
        %v448 = vadd.f32 %v446, %v447
        %v449 = vld [vmem:[%s6] sm:$0x1]
        %451 = vrot.lane.b32.xlu0 %v448, 64
        %v452 = vpop.permute.xlu0 %451
        %v454 = vmul.f32 %v449, %v452
        %v455 = vperm.slane %v435, 0
        %v456 = vmul.f32 %v434, %v455
        %v457 = vpack.c.bf16 %v456, %v456
        %v460 = vunpack.c.l.b16 %v426
        %v461 = vunpack.c.l.b16 %v427
        %v462 = vpack.c.b16 %v461, %v460
        %463 = vrot.lane.b32.xlu0 %v462, 96
        %v464 = vpop.permute.xlu0 %463
        %vm465 = vcmask 261120
        %v467 = vsel %vm465, %v457, 0
        %v470 = vsel %vm465, %v464, 0
        %472 = vmatpush.bf16.xpose.msra.mxu0 0
        %473 = vmatpush.bf16.xpose.msra.mxu0 0
        %474 = vmatpush.bf16.xpose.msra.mxu0 0
        %475 = vmatpush.bf16.xpose.msra.mxu0 0
        %476 = vmatpush.bf16.xpose.msra.mxu0 0
        %477 = vmatpush.bf16.xpose.msra.mxu0 0
        %478 = vmatpush.bf16.xpose.msra.mxu0 0
        %479 = vmatpush.bf16.xpose.msra.mxu0 %v470
        %480 = vmatmul.bf16.gmra.mxu0 %v467
        %v481 = vpop.f32.mrf.mxu0
        %v482 = vadd.f32 0.0, %v481
        %v483 = vpop.f32.mrf.mxu0
        %484 = vdwg.mxu0
        %vm485 = vcmask 130048
        %v486 = vsel %vm485, %v482, -inf
        %487 = vmax.xlane.f32.xlu0 %v486
        %v488 = vpop.xlane.xlu0 %487
        %v489 = vsub.f32 %v482, %v488
        %v490 = vmul.f32 %v489, 1.442695
        %v491 = vpow.pop %v490
        %v492 = vsel %vm485, %v491, 0.0
        %493 = vadd.xlane.f32.xlu0 %v492
        %v494 = vpop.xlane.xlu0 %493
        %v495 = vrcp.pop %v494
        %v496 = vmul.f32 %v491, %v495
        %v497 = vpack.c.bf16 %v496, %v496
        %498 = vrot.lane.b32.xlu0 %v462, 64
        %v499 = vpop.permute.xlu0 %498
        %v502 = vsel %vm485, %v497, 0
        %504 = vmatpush.bf16.msra.mxu0 0
        %505 = vmatpush.bf16.msra.mxu0 0
        %506 = vmatpush.bf16.msra.mxu0 0
        %507 = vmatpush.bf16.msra.mxu0 0
        %508 = vmatpush.bf16.msra.mxu0 0
        %509 = vmatpush.bf16.msra.mxu0 0
        %510 = vmatpush.bf16.msra.mxu0 0
        %511 = vmatpush.bf16.msra.mxu0 %v499
        %512 = vmatmul.bf16.gmra.mxu0 %v502
        %v513 = vpop.f32.mrf.mxu0
        %v514 = vadd.f32 0.0, %v513
        %v515 = vpop.f32.mrf.mxu0
        %516 = vdwg.mxu0
        %v517 = vperm.slane %v436, 0
        %v518 = vmul.f32 %v514, %v517
        %v520 = vperm.slane %v454, 0
        %v522 = vadd.f32 %v520, %v518
        %v523 = vperm.slane %v435, 1
        %v524 = vmul.f32 %v434, %v523
        %v525 = vpack.c.bf16 %v524, %v524
        %v527 = vsel %vm465, %v525, 0
        %529 = vmatpush.bf16.xpose.msra.mxu0 0
        %530 = vmatpush.bf16.xpose.msra.mxu0 0
        %531 = vmatpush.bf16.xpose.msra.mxu0 0
        %532 = vmatpush.bf16.xpose.msra.mxu0 0
        %533 = vmatpush.bf16.xpose.msra.mxu0 0
        %534 = vmatpush.bf16.xpose.msra.mxu0 0
        %535 = vmatpush.bf16.xpose.msra.mxu0 0
        %536 = vmatpush.bf16.xpose.msra.mxu0 %v470
        %537 = vmatmul.bf16.gmra.mxu0 %v527
        %v538 = vpop.f32.mrf.mxu0
        %v539 = vadd.f32 0.0, %v538
        %v540 = vpop.f32.mrf.mxu0
        %541 = vdwg.mxu0
        %v542 = vsel %vm485, %v539, -inf
        %543 = vmax.xlane.f32.xlu0 %v542
        %v544 = vpop.xlane.xlu0 %543
        %v545 = vsub.f32 %v539, %v544
        %v546 = vmul.f32 %v545, 1.442695
        %v547 = vpow.pop %v546
        %v548 = vsel %vm485, %v547, 0.0
        %549 = vadd.xlane.f32.xlu0 %v548
        %v550 = vpop.xlane.xlu0 %549
        %v551 = vrcp.pop %v550
        %v552 = vmul.f32 %v547, %v551
        %v553 = vpack.c.bf16 %v552, %v552
        %v555 = vsel %vm485, %v553, 0
        %557 = vmatpush.bf16.msra.mxu0 0
        %558 = vmatpush.bf16.msra.mxu0 0
        %559 = vmatpush.bf16.msra.mxu0 0
        %560 = vmatpush.bf16.msra.mxu0 0
        %561 = vmatpush.bf16.msra.mxu0 0
        %562 = vmatpush.bf16.msra.mxu0 0
        %563 = vmatpush.bf16.msra.mxu0 0
        %564 = vmatpush.bf16.msra.mxu0 %v499
        %565 = vmatmul.bf16.gmra.mxu0 %v555
        %v566 = vpop.f32.mrf.mxu0
        %v567 = vadd.f32 0.0, %v566
        %v568 = vpop.f32.mrf.mxu0
        %569 = vdwg.mxu0
        %v570 = vperm.slane %v436, 1
        %v571 = vmul.f32 %v567, %v570
        %v572 = vadd.f32 %v522, %v571
        %v573 = vperm.slane %v435, 2
        %v574 = vmul.f32 %v434, %v573
        %v575 = vpack.c.bf16 %v574, %v574
        %v577 = vsel %vm465, %v575, 0
        %579 = vmatpush.bf16.xpose.msra.mxu0 0
        %580 = vmatpush.bf16.xpose.msra.mxu0 0
        %581 = vmatpush.bf16.xpose.msra.mxu0 0
        %582 = vmatpush.bf16.xpose.msra.mxu0 0
        %583 = vmatpush.bf16.xpose.msra.mxu0 0
        %584 = vmatpush.bf16.xpose.msra.mxu0 0
        %585 = vmatpush.bf16.xpose.msra.mxu0 0
        %586 = vmatpush.bf16.xpose.msra.mxu0 %v470
        %587 = vmatmul.bf16.gmra.mxu0 %v577
        %v588 = vpop.f32.mrf.mxu0
        %v589 = vadd.f32 0.0, %v588
        %v590 = vpop.f32.mrf.mxu0
        %591 = vdwg.mxu0
        %v592 = vsel %vm485, %v589, -inf
        %593 = vmax.xlane.f32.xlu0 %v592
        %v594 = vpop.xlane.xlu0 %593
        %v595 = vsub.f32 %v589, %v594
        %v596 = vmul.f32 %v595, 1.442695
        %v597 = vpow.pop %v596
        %v598 = vsel %vm485, %v597, 0.0
        %599 = vadd.xlane.f32.xlu0 %v598
        %v600 = vpop.xlane.xlu0 %599
        %v601 = vrcp.pop %v600
        %v602 = vmul.f32 %v597, %v601
        %v603 = vpack.c.bf16 %v602, %v602
        %v605 = vsel %vm485, %v603, 0
        %607 = vmatpush.bf16.msra.mxu0 0
        %608 = vmatpush.bf16.msra.mxu0 0
        %609 = vmatpush.bf16.msra.mxu0 0
        %610 = vmatpush.bf16.msra.mxu0 0
        %611 = vmatpush.bf16.msra.mxu0 0
        %612 = vmatpush.bf16.msra.mxu0 0
        %613 = vmatpush.bf16.msra.mxu0 0
        %614 = vmatpush.bf16.msra.mxu0 %v499
        %615 = vmatmul.bf16.gmra.mxu0 %v605
        %v616 = vpop.f32.mrf.mxu0
        %v617 = vadd.f32 0.0, %v616
        %v618 = vpop.f32.mrf.mxu0
        %619 = vdwg.mxu0
        %v620 = vperm.slane %v436, 2
        %v621 = vmul.f32 %v617, %v620
        %v622 = vadd.f32 %v572, %v621
        %v623 = vperm.slane %v435, 3
        %v624 = vmul.f32 %v434, %v623
        %v625 = vpack.c.bf16 %v624, %v624
        %v627 = vsel %vm465, %v625, 0
        %629 = vmatpush.bf16.xpose.msra.mxu0 0
        %630 = vmatpush.bf16.xpose.msra.mxu0 0
        %631 = vmatpush.bf16.xpose.msra.mxu0 0
        %632 = vmatpush.bf16.xpose.msra.mxu0 0
        %633 = vmatpush.bf16.xpose.msra.mxu0 0
        %634 = vmatpush.bf16.xpose.msra.mxu0 0
        %635 = vmatpush.bf16.xpose.msra.mxu0 0
        %636 = vmatpush.bf16.xpose.msra.mxu0 %v470
        %637 = vmatmul.bf16.gmra.mxu0 %v627
        %v638 = vpop.f32.mrf.mxu0
        %v639 = vadd.f32 0.0, %v638
        %v640 = vpop.f32.mrf.mxu0
        %641 = vdwg.mxu0
        %v642 = vsel %vm485, %v639, -inf
        %643 = vmax.xlane.f32.xlu0 %v642
        %v644 = vpop.xlane.xlu0 %643
        %v645 = vsub.f32 %v639, %v644
        %v646 = vmul.f32 %v645, 1.442695
        %v647 = vpow.pop %v646
        %v648 = vsel %vm485, %v647, 0.0
        %649 = vadd.xlane.f32.xlu0 %v648
        %v650 = vpop.xlane.xlu0 %649
        %v651 = vrcp.pop %v650
        %v652 = vmul.f32 %v647, %v651
        %v653 = vpack.c.bf16 %v652, %v652
        %v655 = vsel %vm485, %v653, 0
        %657 = vmatpush.bf16.msra.mxu0 0
        %658 = vmatpush.bf16.msra.mxu0 0
        %659 = vmatpush.bf16.msra.mxu0 0
        %660 = vmatpush.bf16.msra.mxu0 0
        %661 = vmatpush.bf16.msra.mxu0 0
        %662 = vmatpush.bf16.msra.mxu0 0
        %663 = vmatpush.bf16.msra.mxu0 0
        %664 = vmatpush.bf16.msra.mxu0 %v499
        %665 = vmatmul.bf16.gmra.mxu0 %v655
        %v666 = vpop.f32.mrf.mxu0
        %v667 = vadd.f32 0.0, %v666
        %v668 = vpop.f32.mrf.mxu0
        %669 = vdwg.mxu0
        %v670 = vperm.slane %v436, 3
        %v671 = vmul.f32 %v667, %v670
        %v672 = vadd.f32 %v622, %v671
        %v673 = vpack.c.bf16 %v672, %v672
        %v674 = vld [vmem:[#allocation8] sm:$0xf]
        %v675 = vld [vmem:[#allocation8 + $0x4] sm:$0xf]
        %v676 = vld [vmem:[#allocation8 + $0x8] sm:$0xf]
        %v677 = vld [vmem:[#allocation8 + $0xc] sm:$0xf]
        %v678 = vld [vmem:[#allocation9] sm:$0x1]
        %v680 = vperm.slane %v678, 0
        %v686 = vunpack.c.l.b16 %v674
        %v687 = vunpack.c.l.b16 %v675
        %v688 = vunpack.c.l.b16 %v676
        %v689 = vunpack.c.l.b16 %v677
        %v690 = vpack.c.b16 %v687, %v686
        %v691 = vpack.c.b16 %v689, %v688
        %v695 = vsel %vm465, %v673, 0
        %697 = vmatpush.bf16.msra.mxu0 0
        %698 = vmatpush.bf16.msra.mxu0 0
        %699 = vmatpush.bf16.msra.mxu0 0
        %700 = vmatpush.bf16.msra.mxu0 0
        %701 = vmatpush.bf16.msra.mxu0 0
        %702 = vmatpush.bf16.msra.mxu0 0
        %703 = vmatpush.bf16.msra.mxu0 %v691
        %704 = vmatpush.bf16.msra.mxu0 %v690
        %705 = vmatmul.bf16.gmra.mxu0 %v695
        %v706 = vpop.f32.mrf.mxu0
        %v707 = vadd.f32 %v680, %v706
        %v708 = vpop.f32.mrf.mxu0
        %709 = vdwg.mxu0
        %710 = vst.msk [vmem:[%s374] sm:$0xff] %vm465, %v707
        %s711 = sand.u32 %s200, 1
        %s712 = scalar_lea.sflag [#allocation5], %s711
        %s713 = sand.u32 %s200, 1
        %s714 = smul.addr %s713, 8
        %s715 = scalar_lea.vmem [#allocation12], %s714
        // Predicated region
        $region73: #{tpu_custom_call.1} parent=47 // pred_check
          %p716 = pneg %p210
        $region74: #{tpu_custom_call.1} parent=47 // pred_check_branch
          %718 = sbr.rel (%p716) target = $region76
        $region75: #{tpu_custom_call.1} parent=47 // pred_region
          %720 = vsyncadd %s712, 0
          %s721 = smul.addr %s30, 2
          %s722 = sadd.s32 %s31, %s721
          %s723 = smul.addr %s722, 8
          %s724 = scalar_lea.hbm %s7, %s723
          %s726 = sshll.u32 %s715, 4
          %s727 = int_to_ptr.vmem [resolvable:$true] %s726
          %s728 = sshll.u32 %s724, 4
          %s729 = int_to_ptr.hbm [resolvable:$true] %s728
          %731 = dma.vmem_to_hbm [thread:$0]  %s727, 128, %s729, %s712
        $region76: #{tpu_custom_call.1} parent=47 // pred_fallthru
          _
      $region48: #{tpu_custom_call.1} parent=5 // pred_fallthru
        _
      %p732 = scmp.le.s32.totalorder 2, %s21
      // Predicated region
      $region77: #{tpu_custom_call.1} parent=5 // pred_check
        %p733 = pneg %p732
      $region78: #{tpu_custom_call.1} parent=5 // pred_check_branch
        %735 = sbr.rel (%p733) target = $region80
      $region79: #{tpu_custom_call.1} parent=5 // pred_region
        %s736 = ssub.s32 %s21, 2
        // Predicated region
        $region81: #{tpu_custom_call.1} parent=79 // pred_check
          %p737 = pneg %p216
        $region82: #{tpu_custom_call.1} parent=79 // pred_check_branch
          %739 = sbr.rel (%p737) target = $region84
        $region83: #{tpu_custom_call.1} parent=79 // pred_region
          %s740 = sand.u32 %s201, 1
          %s741 = scalar_lea.sflag [#allocation5], %s740
          %s742 = sand.u32 %s201, 1
          %s743 = smul.addr %s742, 8
          %s744 = scalar_lea.vmem [#allocation12], %s743
          %746 = dma.done %s741, 128
        $region84: #{tpu_custom_call.1} parent=79 // pred_fallthru
          _
      $region80: #{tpu_custom_call.1} parent=5 // pred_fallthru
        _
    $region6: #{tpu_custom_call.1} parent=1 // loop_footer
      %s25 = sadd.s32 1, %s21
    $region7: #{tpu_custom_call.1} parent=1 // loop_footer_branch
      %20 = sbr.rel target = $region3
    $region8: #{tpu_custom_call.1} parent=1 // loop_exit
      _
    %747 = vsyncpa [#allocation4], 1
    %s748 = scalar_lea.sflag [#allocation4], 1
    %749 = vsyncpa %s748, 1
    %750 = vsyncpa [#allocation7], 1
    %751 = vsyncpa [#allocation10], 1
    %752 = vsyncpa [#allocation5], 1
    %s753 = scalar_lea.sflag [#allocation5], 1
    %754 = vsyncpa %s753, 1

</llo_original>
